<compile_context>
chip_gen: v7x
topology: tpu7x:2x2x1
jax: 0.10.0
libtpu: 0.0.40
codegen_flags: <defaults>
</compile_context>

<pallas_src>
import functools

import jax
import jax.numpy as jnp
from jax.experimental import pallas as pl
from jax.experimental.pallas import tpu as pltpu


def _round_up(x, m):
    return ((x + m - 1) // m) * m


def _lane_fold_sum(x, width):
    """Sum lane-groups of `width`: (R, G*width) -> (R, width). Pure VPU adds."""
    acc = x[:, :width]
    for g in range(1, x.shape[1] // width):
        acc = acc + x[:, g * width:(g + 1) * width]
    return acc


def _lane_fold_max(x, width):
    acc = x[:, :width]
    for g in range(1, x.shape[1] // width):
        acc = jnp.maximum(acc, x[:, g * width:(g + 1) * width])
    return acc


def _ce_mask_kernel(p_ref, t_ref, out_ref, ce_acc, abs_acc, *,
                    hw, col_tile, acc_width, needs_col_mask, hard_labels):
    """One (row_tile, col_tile) tile of the flattened (B*C, H*W) arrays."""
    col = pl.program_id(1)
    ncol = pl.num_programs(1)
    f32 = jnp.float32

    @pl.when(col == 0)
    def _init():
        ce_acc[...] = jnp.zeros_like(ce_acc)
        abs_acc[...] = jnp.zeros_like(abs_acc)

    p = p_ref[...].astype(f32)
    t = t_ref[...].astype(f32)
    one = f32(1.0)
    eps = f32(1e-10)

    # Equivalent to the torch boolean-mask clamp to [1e-10, 1] (differs only by
    # the +1e-10 term for p within ~1e-3 of 0, absorbed by f32 rounding for
    # sigmoid-scale inputs).
    arg_p = jnp.clip(p, eps, one)
    arg_q = jnp.clip(one - p, eps, one)

    if hard_labels:
        # Targets guaranteed exactly 0/1: one EUP log per element.
        c_e = jnp.log(jnp.where(t > f32(0.5), arg_p, arg_q))
    else:
        # log_q + t*(log_p - log_q) == t*log_p + (1-t)*log_q (1 fewer VALU op).
        log_p = jnp.log(arg_p)
        log_q = jnp.log(arg_q)
        c_e = log_q + t * (log_p - log_q)

    abs_t = jnp.abs(t)

    if needs_col_mask:
        # Last column block may run past H*W: zero the out-of-range lanes so
        # they contribute nothing to the sum / max (kills any garbage/NaN).
        lane = jax.lax.broadcasted_iota(jnp.int32, c_e.shape, 1)
        valid = (col * col_tile + lane) < hw
        c_e = jnp.where(valid, c_e, f32(0.0))
        abs_t = jnp.where(valid, abs_t, f32(0.0))

    # Fold the tile down to `acc_width` lanes on the VPU, then do a narrow
    # accumulator read-modify-write (instead of a full-tile RMW).
    ce_acc[...] = ce_acc[...] + _lane_fold_sum(c_e, acc_width)
    abs_acc[...] = jnp.maximum(abs_acc[...], _lane_fold_max(abs_t, acc_width))

    @pl.when(col == ncol - 1)
    def _finalize():
        ce_col = -jnp.sum(ce_acc[...], axis=1, keepdims=True)
        # sign(max|t|) == (max|t| > 0) since |t| >= 0.
        mask_col = (jnp.max(abs_acc[...], axis=1, keepdims=True)
                    > f32(0.0)).astype(f32)
        # Packed output: column 0 = c_e, column 1 = mask.
        out_ref[...] = jnp.concatenate([ce_col, mask_col], axis=1)


def loss_function(p, t, *, max_row_tile=256, max_col_tile=2048,
                  hard_labels=False, input_buffers=2):
    assert p.shape == t.shape and p.ndim == 4
    B, C, H, W = p.shape
    BC, HW = B * C, H * W

    # Lane-dense layout: rows = B*C (sublanes), columns = H*W (lanes).
    # NCHW -> (B*C, H*W) is a contiguous reshape (no HBM copy).
    p2 = p.reshape(BC, HW)
    t2 = t.reshape(BC, HW)

    # Sublane rounding is dtype-aware: bf16 packs 16 rows per vreg.
    sublane = 16 if min(p2.dtype.itemsize, t2.dtype.itemsize) < 4 else 8

    # Row (sublane) tiling.  Guarantee >= 2 row blocks whenever BC allows so
    # the "parallel" axis feeds both v7x TensorCores.  Partial row blocks are
    # safe: rows reduce independently and OOB rows are never written back.
    if BC > sublane:
        row_cap = _round_up(pl.cdiv(BC, 2), sublane)
    else:
        row_cap = _round_up(BC, sublane)
    row_tile = max(sublane, min(_round_up(max_row_tile, sublane), row_cap))
    grid_rows = pl.cdiv(BC, row_tile)

    # Column (lane / reduction) tiling.  No jnp.pad: prefer a 128-multiple
    # divisor of HW; otherwise mask tail columns inside the kernel.
    if HW <= max_col_tile:
        col_tile, needs_col_mask = HW, False
    else:
        base = max(128, (max_col_tile // 128) * 128)
        col_tile, needs_col_mask = base, (HW % base != 0)
        for cand in range(base, max(127, base // 2 - 1), -128):
            if HW % cand == 0:
                col_tile, needs_col_mask = cand, False
                break
    grid_cols = pl.cdiv(HW, col_tile)

    # Accumulator lane width: 128 when the tile folds cleanly, else full width
    # (only when col_tile == HW and HW is not a multiple of 128).
    acc_width = 128 if col_tile % 128 == 0 else col_tile

    # VMEM budget: pipelined input buffers + narrow accumulators + outputs.
    in_buf_bytes = input_buffers * row_tile * col_tile * (
        p2.dtype.itemsize + t2.dtype.itemsize)
    scratch_bytes = 2 * row_tile * acc_width * 4
    out_buf_bytes = 2 * row_tile * 2 * 4
    needed = in_buf_bytes + scratch_bytes + out_buf_bytes
    try:
        vmem_cap = pltpu.get_tpu_info().vmem_capacity_bytes
    except Exception:  # pragma: no cover - info query unavailable
        vmem_cap = 128 << 20
    vmem_limit = int(min(0.75 * vmem_cap, max(needed + (8 << 20), 32 << 20)))
    vmem_limit = max(vmem_limit, needed + (4 << 20))

    n_elems = B * C * H * W
    in_bytes = (p2.size * p2.dtype.itemsize) + (t2.size * t2.dtype.itemsize)
    cost = pl.CostEstimate(
        flops=12 * n_elems,
        transcendentals=(1 if hard_labels else 2) * n_elems,
        bytes_accessed=int(in_bytes) + 8 * BC)

    def _in_spec():
        kwargs = {}
        if input_buffers != 2:
            # Optional deeper pipelining (worth sweeping on v7x after the
            # narrow accumulators freed VMEM); default path untouched.
            kwargs["pipeline_mode"] = pl.Buffered(input_buffers)
        return pl.BlockSpec((row_tile, col_tile), lambda r, c: (r, c), **kwargs)

    kernel = functools.partial(
        _ce_mask_kernel, hw=HW, col_tile=col_tile, acc_width=acc_width,
        needs_col_mask=needs_col_mask, hard_labels=hard_labels)

    out = pl.pallas_call(
        kernel,
        out_shape=jax.ShapeDtypeStruct((BC, 2), jnp.float32),
        grid_spec=pltpu.PrefetchScalarGridSpec(
            num_scalar_prefetch=0,
            grid=(grid_rows, grid_cols),
            in_specs=[_in_spec(), _in_spec()],
            out_specs=pl.BlockSpec((row_tile, 2), lambda r, c: (r, 0)),
            scratch_shapes=[pltpu.VMEM((row_tile, acc_width), jnp.float32),
                            pltpu.VMEM((row_tile, acc_width), jnp.float32)]),
        compiler_params=pltpu.CompilerParams(
            dimension_semantics=("parallel", "arbitrary"),
            vmem_limit_bytes=vmem_limit),
        cost_estimate=cost,
    )(p2, t2)

    # Tiny (B, C)-sized epilogue (matches torch's final sums/divide/mean).
    # NOTE: produces NaN if every channel of a batch has an all-zero target,
    # exactly like the PyTorch reference.
    ce = out[:, 0].reshape(B, C)
    mask = out[:, 1].reshape(B, C)
    per_batch = jnp.sum(ce * mask, axis=1) / jnp.sum(mask, axis=1)
    return jnp.mean(per_batch)


def _reference(p, t):
    # Pure-JAX mirror of the exact PyTorch forward, for verification.
    p = p.astype(jnp.float32)
    t = t.astype(jnp.float32)
    q = 1.0 - p
    arg_p = (1e-10 * (q > 1e-10) + p * (p > 1e-10) * (p < 1.0)
             + 1.0 * (1.0 - (p < 1.0)))
    arg_q = (1e-10 * (p > 1e-10) + q * (q > 1e-10) * (q < 1.0)
             + 1.0 * (1.0 - (q < 1.0)))
    c_e = t * jnp.log(arg_p) + (1.0 - t) * jnp.log(arg_q)
    c_e = -jnp.sum(jnp.sum(c_e, axis=3), axis=2)
    mask = jnp.sign(jnp.max(jnp.max(jnp.abs(t), axis=3), axis=2))
    c_e = c_e * mask
    c_e = jnp.sum(c_e, axis=1) / jnp.sum(mask, axis=1)
    return jnp.mean(c_e)


if __name__ == "__main__":
    key = jax.random.PRNGKey(0)
    kp, kt = jax.random.split(key)
    B, C, H, W = 2, 4, 16, 16

    # p: probabilities in (0, 1); t: binary targets.  t is fed to the kernel
    # as bf16 (exact for 0/1 labels, half the HBM traffic).
    p = jax.nn.sigmoid(jax.random.normal(kp, (B, C, H, W), dtype=jnp.float32))
    t_bits = jax.random.uniform(kt, (B, C, H, W)) > 0.5
    t_bf16 = t_bits.astype(jnp.bfloat16)
    t_f32 = t_bits.astype(jnp.float32)

    ref = jax.block_until_ready(_reference(p, t_f32))

    # General (soft-label-capable) path, bf16 targets.
    out = jax.block_until_ready(loss_function(p, t_bf16))
    assert jnp.allclose(out, ref, rtol=1e-5, atol=1e-5), (out, ref)

    # Hard-label fast path (single log per element).
    out_hard = jax.block_until_ready(loss_function(p, t_bf16, hard_labels=True))
    assert jnp.allclose(out_hard, ref, rtol=1e-5, atol=1e-5), (out_hard, ref)

    # Partial row block: B*C not a multiple of the sublane tile.
    B2, C2 = 3, 5
    kp2, kt2 = jax.random.split(jax.random.PRNGKey(1))
    p_b = jax.nn.sigmoid(jax.random.normal(kp2, (B2, C2, H, W), dtype=jnp.float32))
    t_b = (jax.random.uniform(kt2, (B2, C2, H, W)) > 0.5).astype(jnp.float32)
    out_b = jax.block_until_ready(loss_function(p_b, t_b))
    ref_b = jax.block_until_ready(_reference(p_b, t_b))
    assert jnp.allclose(out_b, ref_b, rtol=1e-5, atol=1e-5), (out_b, ref_b)

    print("KERNEL_OK")
</pallas_src>

<mosaic_0001>
module attributes {stable_mosaic.version = 11 : i64} {
  func.func @_ce_mask_kernel(%arg0: i32, %arg1: i32, %arg2: memref<16x256xf32, #tpu.memory_space<vmem>>, %arg3: memref<16x256xbf16, #tpu.memory_space<vmem>>, %arg4: memref<16x2xf32, #tpu.memory_space<vmem>>, %arg5: memref<16x128xf32, #tpu.memory_space<vmem>>, %arg6: memref<16x128xf32, #tpu.memory_space<vmem>>) attributes {dimension_semantics = [#tpu.dimension_semantics<parallel>, #tpu.dimension_semantics<arbitrary>], iteration_bounds = array<i64: 1, 1>, scalar_prefetch = 0 : i64, scratch_operands = 2 : i64, tpu.core_type = #tpu.core_type<tc>, window_params = [{transform_indices = @transform_0, window_bounds = array<i64: 16, 256>}, {transform_indices = @transform_1, window_bounds = array<i64: 16, 256>}, {transform_indices = @transform_2, window_bounds = array<i64: 16, 2>}]} {
    %c0_i32 = arith.constant 0 : i32
    %0 = arith.cmpi eq, %arg1, %c0_i32 : i32
    %1 = arith.extui %0 : i1 to i32
    %c0_i32_0 = arith.constant 0 : i32
    %2 = arith.cmpi ne, %1, %c0_i32_0 : i32
    scf.if %2 {
      %cst_18 = arith.constant 0.000000e+00 : f32
      %37 = vector.broadcast %cst_18 : f32 to vector<16x128xf32>
      %c0_19 = arith.constant 0 : index
      %c0_20 = arith.constant 0 : index
      %38 = vector.load %arg5[%c0_19, %c0_20] : memref<16x128xf32, #tpu.memory_space<vmem>>, vector<16x128xf32>
      tpu.vector_store %arg5[%c0_19, %c0_20], %37 {strides = array<i32>} : memref<16x128xf32, #tpu.memory_space<vmem>>, vector<16x128xf32>,
      %cst_21 = arith.constant 0.000000e+00 : f32
      %39 = vector.broadcast %cst_21 : f32 to vector<16x128xf32>
      %c0_22 = arith.constant 0 : index
      %c0_23 = arith.constant 0 : index
      %40 = vector.load %arg6[%c0_22, %c0_23] : memref<16x128xf32, #tpu.memory_space<vmem>>, vector<16x128xf32>
      tpu.vector_store %arg6[%c0_22, %c0_23], %39 {strides = array<i32>} : memref<16x128xf32, #tpu.memory_space<vmem>>, vector<16x128xf32>,
    } else {
    }
    %c0 = arith.constant 0 : index
    %c0_1 = arith.constant 0 : index
    %3 = vector.load %arg2[%c0, %c0_1] : memref<16x256xf32, #tpu.memory_space<vmem>>, vector<16x256xf32>
    %c0_2 = arith.constant 0 : index
    %c0_3 = arith.constant 0 : index
    %4 = vector.load %arg3[%c0_2, %c0_3] : memref<16x256xbf16, #tpu.memory_space<vmem>>, vector<16x256xbf16>
    %5 = arith.extf %4 : vector<16x256xbf16> to vector<16x256xf32>
    %cst = arith.constant 1.000000e-10 : f32
    %cst_4 = arith.constant 1.000000e+00 : f32
    %6 = vector.broadcast %cst : f32 to vector<16x256xf32>
    %7 = arith.maximumf %6, %3 : vector<16x256xf32>
    %8 = vector.broadcast %cst_4 : f32 to vector<16x256xf32>
    %9 = arith.minimumf %8, %7 : vector<16x256xf32>
    %cst_5 = arith.constant 1.000000e+00 : f32
    %10 = vector.broadcast %cst_5 : f32 to vector<16x256xf32>
    %11 = arith.subf %10, %3 : vector<16x256xf32>
    %cst_6 = arith.constant 1.000000e-10 : f32
    %cst_7 = arith.constant 1.000000e+00 : f32
    %12 = vector.broadcast %cst_6 : f32 to vector<16x256xf32>
    %13 = arith.maximumf %12, %11 : vector<16x256xf32>
    %14 = vector.broadcast %cst_7 : f32 to vector<16x256xf32>
    %15 = arith.minimumf %14, %13 : vector<16x256xf32>
    %16 = math.log %9 : vector<16x256xf32>
    %17 = math.log %15 : vector<16x256xf32>
    %18 = arith.subf %16, %17 : vector<16x256xf32>
    %19 = arith.mulf %5, %18 : vector<16x256xf32>
    %20 = arith.addf %17, %19 : vector<16x256xf32>
    %21 = math.absf %5 : vector<16x256xf32>
    %c0_8 = arith.constant 0 : index
    %c0_9 = arith.constant 0 : index
    %22 = vector.load %arg5[%c0_8, %c0_9] : memref<16x128xf32, #tpu.memory_space<vmem>>, vector<16x128xf32>
    %23 = vector.extract_strided_slice %20 {offsets = [0, 0], sizes = [16, 128], strides = [1, 1]} : vector<16x256xf32> to vector<16x128xf32>
    %24 = vector.extract_strided_slice %20 {offsets = [0, 128], sizes = [16, 128], strides = [1, 1]} : vector<16x256xf32> to vector<16x128xf32>
    %25 = arith.addf %23, %24 : vector<16x128xf32>
    %26 = arith.addf %22, %25 : vector<16x128xf32>
    %c0_10 = arith.constant 0 : index
    %c0_11 = arith.constant 0 : index
    %27 = vector.load %arg5[%c0_10, %c0_11] : memref<16x128xf32, #tpu.memory_space<vmem>>, vector<16x128xf32>
    tpu.vector_store %arg5[%c0_10, %c0_11], %26 {strides = array<i32>} : memref<16x128xf32, #tpu.memory_space<vmem>>, vector<16x128xf32>,
    %c0_12 = arith.constant 0 : index
    %c0_13 = arith.constant 0 : index
    %28 = vector.load %arg6[%c0_12, %c0_13] : memref<16x128xf32, #tpu.memory_space<vmem>>, vector<16x128xf32>
    %29 = vector.extract_strided_slice %21 {offsets = [0, 0], sizes = [16, 128], strides = [1, 1]} : vector<16x256xf32> to vector<16x128xf32>
    %30 = vector.extract_strided_slice %21 {offsets = [0, 128], sizes = [16, 128], strides = [1, 1]} : vector<16x256xf32> to vector<16x128xf32>
    %31 = arith.maximumf %29, %30 : vector<16x128xf32>
    %32 = arith.maximumf %28, %31 : vector<16x128xf32>
    %c0_14 = arith.constant 0 : index
    %c0_15 = arith.constant 0 : index
    %33 = vector.load %arg6[%c0_14, %c0_15] : memref<16x128xf32, #tpu.memory_space<vmem>>, vector<16x128xf32>
    tpu.vector_store %arg6[%c0_14, %c0_15], %32 {strides = array<i32>} : memref<16x128xf32, #tpu.memory_space<vmem>>, vector<16x128xf32>,
    %c0_i32_16 = arith.constant 0 : i32
    %34 = arith.cmpi eq, %arg1, %c0_i32_16 : i32
    %35 = arith.extui %34 : i1 to i32
    %c0_i32_17 = arith.constant 0 : i32
    %36 = arith.cmpi ne, %35, %c0_i32_17 : i32
    scf.if %36 {
      %c0_18 = arith.constant 0 : index
      %c0_19 = arith.constant 0 : index
      %37 = vector.load %arg5[%c0_18, %c0_19] : memref<16x128xf32, #tpu.memory_space<vmem>>, vector<16x128xf32>
      %cst_20 = arith.constant dense<0.000000e+00> : vector<16xf32>
      %38 = vector.multi_reduction <add>, %37, %cst_20 [1] : vector<16x128xf32> to vector<16xf32>
      %39 = vector.shape_cast %38 : vector<16xf32> to vector<16x1xf32>
      %cst_21 = arith.constant 0.000000e+00 : f32
      %40 = vector.broadcast %cst_21 : f32 to vector<16x1xf32>
      %41 = arith.subf %40, %39 : vector<16x1xf32>
      %c0_22 = arith.constant 0 : index
      %c0_23 = arith.constant 0 : index
      %42 = vector.load %arg6[%c0_22, %c0_23] : memref<16x128xf32, #tpu.memory_space<vmem>>, vector<16x128xf32>
      %cst_24 = arith.constant dense<0xFF800000> : vector<16xf32>
      %43 = vector.multi_reduction <maximumf>, %42, %cst_24 [1] : vector<16x128xf32> to vector<16xf32>
      %44 = vector.shape_cast %43 : vector<16xf32> to vector<16x1xf32>
      %cst_25 = arith.constant 0.000000e+00 : f32
      %45 = vector.broadcast %cst_25 : f32 to vector<16x1xf32>
      %46 = arith.cmpf ogt, %44, %45 : vector<16x1xf32>
      %47 = arith.extui %46 : vector<16x1xi1> to vector<16x1xi32>
      %48 = arith.sitofp %47 : vector<16x1xi32> to vector<16x1xf32>
      %49 = tpu.concatenate %41, %48 in 1 : vector<16x1xf32>, vector<16x1xf32> -> vector<16x2xf32>
      %c0_26 = arith.constant 0 : index
      %c0_27 = arith.constant 0 : index
      %50 = vector.load %arg4[%c0_26, %c0_27] : memref<16x2xf32, #tpu.memory_space<vmem>>, vector<16x2xf32>
      tpu.vector_store %arg4[%c0_26, %c0_27], %49 {strides = array<i32>} : memref<16x2xf32, #tpu.memory_space<vmem>>, vector<16x2xf32>,
    } else {
    }
    return
  }
  func.func @transform_0(%arg0: i32, %arg1: i32) -> (i32, i32) {
    %c0_i32 = arith.constant 0 : i32
    return %arg0, %arg1 : i32, i32
  }
  func.func @transform_1(%arg0: i32, %arg1: i32) -> (i32, i32) {
    %c0_i32 = arith.constant 0 : i32
    return %arg0, %arg1 : i32, i32
  }
  func.func @transform_2(%arg0: i32, %arg1: i32) -> (i32, i32) {
    %c0_i32 = arith.constant 0 : i32
    %c0_i32_0 = arith.constant 0 : i32
    return %arg0, %c0_i32 : i32, i32
  }
}

</mosaic_0001>

<llo_original>
// kernel: tpu_custom_call.1
$region0: #{tpu_custom_call.1}
  #allocation0 [shape = 'u32[]', space=smem, size = 0x4, offset = 0x4, fixed_abs, tag = 'smem constant byte address 0x4 - core index']
  #allocation1 [shape = 'u32[144,128]{1,0:T(1,128)}', space=vmem, size = 0x12000, scoped, tag = 'internal scratch']
  #allocation2 [shape = 'f32[16,128]{1,0:T(8,128)}', space=vmem, size = 0x2000, scoped, tag = 'scratch operand']
  #allocation3 [shape = 'f32[16,128]{1,0:T(8,128)}', space=vmem, size = 0x2000, scoped, tag = 'scratch operand']
  %s0 = inlined_call_operand.hbm [shape: f32[8,256], index: 0, kind: input, shape index: {}]
  %s1 = inlined_call_operand.hbm [shape: bf16[8,256], index: 1, kind: input, shape index: {}]
  %s2 = inlined_call_operand.vmem [shape: f32[8,2], index: 2, kind: output, shape index: {}]
  %s3 = sld [smem:[#allocation0]]
  $region68: #{tpu_custom_call.1} parent=0
    _
  %s5 = ssub.s32 1, %s3
  %s6 = scalar_select 0, %s5, %s3
  $region1: #{tpu_custom_call.1} parent=0
    #allocation4 [shape = 'u8[16384]{0}', space=vmem, size = 0x4000, scoped, tag = 'input window, operand 0, single buffered']
    #allocation5 [shape = 's32[1]{0}', space=sflag, size = 0x4, scoped, tag = 'scoped memory for tpu_custom_call.1']
    #allocation6 [shape = 'u8[8192]{0}', space=vmem, size = 0x2000, scoped, tag = 'input window, operand 1, single buffered']
    #allocation7 [shape = 's32[1]{0}', space=sflag, size = 0x4, scoped, tag = 'scoped memory for tpu_custom_call.1']
    #allocation8 [shape = 'u8[8192]{0}', space=vmem, size = 0x2000, scoped, tag = 'output window, operand 0, single buffered']
    %7 = vsyncpa [#allocation5], 0
    %8 = vsyncpa [#allocation7], 0
    // Predicated region
    $region2: #{tpu_custom_call.1} parent=1 // pred_check
      _
    $region3: #{tpu_custom_call.1} parent=1 // pred_check_branch
      %10 = sbr.rel (0) target = $region5
    $region4: #{tpu_custom_call.1} parent=1 // pred_region
      %s12 = ssub.s32 512, 256
      %13 = vsyncadd [#allocation5], %s12
      %s14 = sshll.u32 [#allocation4], 4
      %s15 = int_to_ptr.vmem [resolvable:$true] %s14
      %20 = dma.hbm_to_vmem [thread:$0]  %s0, 256, %s15, [#allocation5], 256, 256, 16
    $region5: #{tpu_custom_call.1} parent=1 // pred_fallthru
      _
    // Predicated region
    $region6: #{tpu_custom_call.1} parent=1 // pred_check
      _
    $region7: #{tpu_custom_call.1} parent=1 // pred_check_branch
      %22 = sbr.rel (0) target = $region9
    $region8: #{tpu_custom_call.1} parent=1 // pred_region
      %s24 = ssub.s32 256, 128
      %25 = vsyncadd [#allocation7], %s24
      %s26 = sshll.u32 [#allocation6], 4
      %s27 = int_to_ptr.vmem [resolvable:$true] %s26
      %32 = dma.hbm_to_vmem [thread:$0]  %s1, 128, %s27, [#allocation7], 128, 128, 8
    $region9: #{tpu_custom_call.1} parent=1 // pred_fallthru
      _
    // Predicated region
    $region10: #{tpu_custom_call.1} parent=1 // pred_check
      _
    $region11: #{tpu_custom_call.1} parent=1 // pred_check_branch
      %34 = sbr.rel (0) target = $region13
    $region12: #{tpu_custom_call.1} parent=1 // pred_region
      %35 = dma.done [#allocation5], 512
    $region13: #{tpu_custom_call.1} parent=1 // pred_fallthru
      _
    // Predicated region
    $region14: #{tpu_custom_call.1} parent=1 // pred_check
      _
    $region15: #{tpu_custom_call.1} parent=1 // pred_check_branch
      %37 = sbr.rel (0) target = $region17
    $region16: #{tpu_custom_call.1} parent=1 // pred_region
      %38 = dma.done [#allocation7], 256
    $region17: #{tpu_custom_call.1} parent=1 // pred_fallthru
      _
    %p39 = scmp.eq.s32.totalorder 0, 0
    // Predicated region
    $region18: #{tpu_custom_call.1} parent=1 // pred_check
      %p40 = pneg %p39
    $region19: #{tpu_custom_call.1} parent=1 // pred_check_branch
      %42 = sbr.rel (%p40) target = $region21
    $region20: #{tpu_custom_call.1} parent=1 // pred_region
      %43 = vst [vmem:[#allocation2] sm:$0xff] 0.0
      %44 = vst [vmem:[#allocation2 + $0x8] sm:$0xff] 0.0
      %45 = vst [vmem:[#allocation3] sm:$0xff] 0.0
      %46 = vst [vmem:[#allocation3 + $0x8] sm:$0xff] 0.0
    $region21: #{tpu_custom_call.1} parent=1 // pred_fallthru
      _
    %v47 = vld [vmem:[#allocation4] sm:$0xff]
    %v48 = vld [vmem:[#allocation4 + $0x8] sm:$0xff]
    %v49 = vld [vmem:[#allocation4 + $0x10] sm:$0xff]
    %v50 = vld [vmem:[#allocation4 + $0x18] sm:$0xff]
    %v51 = vld [vmem:[#allocation6] sm:$0xff]
    %v52 = vld [vmem:[#allocation6 + $0x8] sm:$0xff]
    %v53 = vunpack.c.l.bf16 %v51
    %v54 = vunpack.c.h.bf16 %v51
    %v55 = vunpack.c.l.bf16 %v52
    %v56 = vunpack.c.h.bf16 %v52
    %v57 = vmax.f32 %v47, 1e-10
    %v58 = vmax.f32 %v48, 1e-10
    %v59 = vmax.f32 %v49, 1e-10
    %v60 = vmax.f32 %v50, 1e-10
    %v61 = vmin.f32 %v57, 1.0
    %v62 = vmin.f32 %v58, 1.0
    %v63 = vmin.f32 %v59, 1.0
    %v64 = vmin.f32 %v60, 1.0
    %v65 = vsub.f32 1.0, %v47
    %v66 = vsub.f32 1.0, %v48
    %v67 = vsub.f32 1.0, %v49
    %v68 = vsub.f32 1.0, %v50
    %v69 = vmax.f32 %v65, 1e-10
    %v70 = vmax.f32 %v66, 1e-10
    %v71 = vmax.f32 %v67, 1e-10
    %v72 = vmax.f32 %v68, 1e-10
    %v73 = vmin.f32 %v69, 1.0
    %v74 = vmin.f32 %v70, 1.0
    %v75 = vmin.f32 %v71, 1.0
    %v76 = vmin.f32 %v72, 1.0
    %v77 = vlog2.pop %v61
    %v78 = vmul.f32 %v77, 0.6931472
    %v79 = vlog2.pop %v62
    %v80 = vmul.f32 %v79, 0.6931472
    %v81 = vlog2.pop %v63
    %v82 = vmul.f32 %v81, 0.6931472
    %v83 = vlog2.pop %v64
    %v84 = vmul.f32 %v83, 0.6931472
    %v85 = vlog2.pop %v73
    %v86 = vmul.f32 %v85, 0.6931472
    %v87 = vlog2.pop %v74
    %v88 = vmul.f32 %v87, 0.6931472
    %v89 = vlog2.pop %v75
    %v90 = vmul.f32 %v89, 0.6931472
    %v91 = vlog2.pop %v76
    %v92 = vmul.f32 %v91, 0.6931472
    %v93 = vsub.f32 %v78, %v86
    %v94 = vsub.f32 %v80, %v88
    %v95 = vsub.f32 %v82, %v90
    %v96 = vsub.f32 %v84, %v92
    %v97 = vmul.f32 %v53, %v93
    %v98 = vmul.f32 %v54, %v94
    %v99 = vmul.f32 %v55, %v95
    %v100 = vmul.f32 %v56, %v96
    %v101 = vadd.f32 %v86, %v97
    %v102 = vadd.f32 %v88, %v98
    %v103 = vadd.f32 %v90, %v99
    %v104 = vadd.f32 %v92, %v100
    %v105 = vand.u32 2147483647, %v53
    %v106 = vand.u32 2147483647, %v54
    %v107 = vand.u32 2147483647, %v55
    %v108 = vand.u32 2147483647, %v56
    %v109 = vld [vmem:[#allocation2] sm:$0xff]
    %v110 = vld [vmem:[#allocation2 + $0x8] sm:$0xff]
    %v111 = vadd.f32 %v101, %v102
    %v112 = vadd.f32 %v103, %v104
    %v113 = vadd.f32 %v109, %v111
    %v114 = vadd.f32 %v110, %v112
    %115 = vst [vmem:[#allocation2] sm:$0xff] %v113
    %116 = vst [vmem:[#allocation2 + $0x8] sm:$0xff] %v114
    %v117 = vld [vmem:[#allocation3] sm:$0xff]
    %v118 = vld [vmem:[#allocation3 + $0x8] sm:$0xff]
    %v119 = vmax.f32 %v105, %v106
    %v120 = vmax.f32 %v107, %v108
    %v121 = vmax.f32 %v117, %v119
    %v122 = vmax.f32 %v118, %v120
    %123 = vst [vmem:[#allocation3] sm:$0xff] %v121
    %124 = vst [vmem:[#allocation3 + $0x8] sm:$0xff] %v122
    // Predicated region
    $region22: #{tpu_custom_call.1} parent=1 // pred_check
      %p125 = pneg %p39
    $region23: #{tpu_custom_call.1} parent=1 // pred_check_branch
      %127 = sbr.rel (%p125) target = $region25
    $region24: #{tpu_custom_call.1} parent=1 // pred_region
      %v128 = vld [vmem:[#allocation2] sm:$0xff]
      %v129 = vld [vmem:[#allocation2 + $0x8] sm:$0xff]
      %130 = vadd.xlane.f32.xlu0 %v128
      %v131 = vpop.xlane.xlu0 %130
      %132 = vadd.xlane.f32.xlu0 %v129
      %v133 = vpop.xlane.xlu0 %132
      %v134 = vsub.f32 0.0, %v131
      %v135 = vsub.f32 0.0, %v133
      %v136 = vld [vmem:[#allocation3] sm:$0xff]
      %v137 = vld [vmem:[#allocation3 + $0x8] sm:$0xff]
      %138 = vmax.xlane.f32.xlu0 %v136
      %v139 = vpop.xlane.xlu0 %138
      %140 = vmax.xlane.f32.xlu0 %v137
      %v141 = vpop.xlane.xlu0 %140
      %vm142 = vcmp.gt.f32.partialorder %v139, 0.0
      %vm143 = vcmp.gt.f32.partialorder %v141, 0.0
      %v144 = vsel %vm142, 1, 0
      %v145 = vsel %vm143, 1, 0
      %v146 = vcvt.s32.f32 %v144
      %v147 = vcvt.s32.f32 %v145
      %vm148 = vcmask 7168
      %v149 = vsel %vm148, %v134, %v146
      %v150 = vsel %vm148, %v135, %v147
      %vm151 = vcmask 15360
      %152 = vst.msk [vmem:[#allocation8] sm:$0xff] %vm151, %v149
      %153 = vst.msk [vmem:[#allocation8 + $0x8] sm:$0xff] %vm151, %v150
    $region25: #{tpu_custom_call.1} parent=1 // pred_fallthru
      _
    // Predicated region
    $region26: #{tpu_custom_call.1} parent=1 // pred_check
      _
    $region27: #{tpu_custom_call.1} parent=1 // pred_check_branch
      %155 = sbr.rel (0) target = $region29
    $region28: #{tpu_custom_call.1} parent=1 // pred_region
      // Predicated region
      $region30: #{tpu_custom_call.1} parent=28 // pred_check
        _
      $region31: #{tpu_custom_call.1} parent=28 // pred_check_branch
        %157 = sbr.rel (0) target = $region33
      $region32: #{tpu_custom_call.1} parent=28 // pred_region
        // Predicated region
        $region34: #{tpu_custom_call.1} parent=32 // pred_check
          _
        $region35: #{tpu_custom_call.1} parent=32 // pred_check_branch
          %159 = sbr.rel (0) target = $region37
        $region36: #{tpu_custom_call.1} parent=32 // pred_region
          // Predicated region
          $region49: #{tpu_custom_call.1} parent=36 // pred_check
            _
          $region50: #{tpu_custom_call.1} parent=36 // pred_check_branch
            %174 = sbr.rel (0) target = $region52
          $region51: #{tpu_custom_call.1} parent=36 // pred_region
            loop: start=0, step=1, limit=1
            $region53: #{tpu_custom_call.1} parent=51 // loop_pre_header
              _
            $region54: #{tpu_custom_call.1} parent=51 // loop_header
              %s176 = sphi 0, %s180
              %p177 = scmp.ge.s32.totalorder %s176, 1
              %s181 = sphi [#allocation8], [#allocation8]
              %s182 = sphi %s2, %s2
            $region55: #{tpu_custom_call.1} parent=51 // loop_header_branch
              %179 = sbr.rel (%p177) target = $region59
            $region56: #{tpu_custom_call.1} parent=51 // loop_body
              %v183 = vld [vmem:[%s181] sm:$0xff]
              %184 = vst [vmem:[%s182] sm:$0xff] %v183
            $region57: #{tpu_custom_call.1} parent=51 // loop_footer
              %s180 = sadd.s32 1, %s176
            $region58: #{tpu_custom_call.1} parent=51 // loop_footer_branch
              %175 = sbr.rel target = $region54
            $region59: #{tpu_custom_call.1} parent=51 // loop_exit
              _
          $region52: #{tpu_custom_call.1} parent=36 // pred_fallthru
            _
          // Predicated region
          $region60: #{tpu_custom_call.1} parent=36 // pred_check
            _
          $region61: #{tpu_custom_call.1} parent=36 // pred_check_branch
            %186 = sbr.rel target = $region63
          $region62: #{tpu_custom_call.1} parent=36 // pred_region
            _
          $region63: #{tpu_custom_call.1} parent=36 // pred_fallthru
            _
        $region37: #{tpu_custom_call.1} parent=32 // pred_fallthru
          _
        // Predicated region
        $region38: #{tpu_custom_call.1} parent=32 // pred_check
          _
        $region39: #{tpu_custom_call.1} parent=32 // pred_check_branch
          %161 = sbr.rel target = $region41
        $region40: #{tpu_custom_call.1} parent=32 // pred_region
          loop: start=0, step=1, limit=1
          $region42: #{tpu_custom_call.1} parent=40 // loop_pre_header
            _
          $region43: #{tpu_custom_call.1} parent=40 // loop_header
            %s164 = sphi 0, %s168
            %p165 = scmp.ge.s32.totalorder %s164, 1
            %s169 = sphi [#allocation8], [#allocation8]
            %s170 = sphi %s2, %s2
          $region44: #{tpu_custom_call.1} parent=40 // loop_header_branch
            %167 = sbr.rel (%p165) target = $region48
          $region45: #{tpu_custom_call.1} parent=40 // loop_body
            %v171 = vld [vmem:[%s169] sm:$0xff]
            %172 = vst [vmem:[%s170] sm:$0xff] %v171
          $region46: #{tpu_custom_call.1} parent=40 // loop_footer
            %s168 = sadd.s32 1, %s164
          $region47: #{tpu_custom_call.1} parent=40 // loop_footer_branch
            %163 = sbr.rel target = $region43
          $region48: #{tpu_custom_call.1} parent=40 // loop_exit
            _
        $region41: #{tpu_custom_call.1} parent=32 // pred_fallthru
          _
      $region33: #{tpu_custom_call.1} parent=28 // pred_fallthru
        _
      %187 = vnop
    $region29: #{tpu_custom_call.1} parent=1 // pred_fallthru
      _
    // Predicated region
    $region64: #{tpu_custom_call.1} parent=1 // pred_check
      _
    $region65: #{tpu_custom_call.1} parent=1 // pred_check_branch
      %189 = sbr.rel (0) target = $region67
    $region66: #{tpu_custom_call.1} parent=1 // pred_region
      _
    $region67: #{tpu_custom_call.1} parent=1 // pred_fallthru
      _
    %190 = vsyncpa [#allocation5], 1
    %191 = vsyncpa [#allocation7], 1

</llo_original>
